<compile_context>
chip_gen: v7x
topology: tpu7x:2x2x1
jax: 0.10.0
libtpu: 0.0.40
codegen_flags: <defaults>
</compile_context>

<pallas_src>
import jax
import jax.numpy as jnp
import numpy as np
from jax.experimental import pallas as pl
from jax.experimental.pallas import tpu as pltpu


def _vmem_limit_bytes():
    """Generation-aware VMEM budget.

    v7x: 64 MiB physical per TensorCore -> ~48 MiB budget.
    v5e/v6e: 128 MiB physical -> ~96 MiB budget (capped at 100 MiB).
    """
    cap = 64 * 1024 * 1024  # conservative fallback = v7x physical VMEM
    try:
        info = pltpu.get_tpu_info()
        cap = int(getattr(info, "vmem_capacity_bytes", cap) or cap)
    except Exception:
        pass
    return min((cap * 3) // 4, 100 * 1024 * 1024)


def _block_vmem_bytes(tb, S, E, Dd, enc_bytes):
    """Bytes live per grid step: double-buffered pipeline blocks, resident
    (double-buffered) weights, and in-kernel intermediates."""
    f32 = 4
    enc_blk = 2 * tb * S * E * enc_bytes                  # encoder block x2
    io_blk = 2 * tb * (Dd + S) * f32 + 2 * tb * S * 4     # hidden + output + mask x2
    weights = 2 * (Dd * Dd * f32 + E * Dd * enc_bytes + 2 * Dd * f32)
    interm = (2 * tb * S * Dd                             # proj_e + energy
              + tb * E * Dd                               # broadcast We for batched dot
              + 4 * tb * S) * f32                         # scores / exp / softmax temps
    return enc_blk + io_blk + weights + interm


def _choose_batch_block(B, S, E, Dd, enc_bytes, vmem_limit):
    """Pick TB (batch rows per grid step): largest tile whose encoder block is
    <= ~4 MiB, fits the VMEM budget, divides B, satisfies the (8,128) rule
    (TB % 8 == 0 or TB == B), and keeps >= 2 grid steps when B allows it."""
    budget = int(vmem_limit * 0.8)
    cands = [d for d in range(8, B + 1, 8) if B % d == 0]
    if B not in cands:
        cands.append(B)
    cands.sort()
    fitting = [tb for tb in cands if _block_vmem_bytes(tb, S, E, Dd, enc_bytes) <= budget]
    if not fitting:
        # TODO(synk): S-tiled (flash-style) softmax fallback for very long S.
        raise ValueError("encoder block too large for VMEM; tile S instead")
    target = 4 * 1024 * 1024
    pick = fitting[0]
    for tb in fitting:
        if tb * S * E * enc_bytes <= target:
            pick = tb                    # largest fitting tile under the target
    if B // pick < 2:                    # keep both v7x TensorCores busy if possible
        for tb in reversed(fitting):
            if B // tb >= 2:
                pick = tb
                break
    return pick


def attention_kernel(h_ref, e_ref, m_ref, wh_ref, we_ref, b_ref, v_ref, o_ref):
    """One grid step = TB batch rows.

    h_ref : (TB, Dd)     decoder hidden
    e_ref : (TB, S, E)   encoder outputs (dominant HBM read)
    m_ref : (TB, S)      int32 mask (0 = masked)
    wh_ref: (Dd, Dd)     weight slice multiplying hidden   (pre-transposed)
    we_ref: (E, Dd)      weight slice multiplying encoder  (pre-transposed)
    b_ref : (1, Dd)      bias
    v_ref : (1, 1, Dd)   scoring vector
    o_ref : (TB, S)      softmax attention weights
    """
    tb = e_ref.shape[0]

    # Linear(cat(hidden, enc)) == hidden @ Wh + enc @ We + bias; the bias is
    # folded into the small (TB, Dd) hidden projection.
    proj_h = (
        jnp.dot(h_ref[...].astype(jnp.float32), wh_ref[...],
                preferred_element_type=jnp.float32)
        + b_ref[...]
    )                                                                   # (TB, Dd)

    # Batched MXU matmul over the encoder block (leading batch dim on both
    # operands; We is a tiny weight so the broadcast copy is cheap).
    we = we_ref[...]
    we_b = jnp.broadcast_to(we[None, :, :], (tb,) + we.shape)           # (TB, E, Dd)
    proj_e = jnp.einsum("bse,bed->bsd", e_ref[...], we_b,
                        preferred_element_type=jnp.float32)             # (TB, S, Dd)

    energy = jnp.tanh(proj_e + proj_h[:, None, :])                      # (TB, S, Dd)

    # scores[b, s] = v . energy[b, s, :]  (VPU multiply + XLU lane reduce;
    # the degenerate N=1 MXU matmul buys nothing on this HBM-bound kernel).
    scores = jnp.sum(energy * v_ref[...], axis=-1)                      # (TB, S)
    scores = jnp.where(m_ref[...] == 0, jnp.float32(-1e10), scores)

    # Numerically-stable softmax over S.  Exact divide: it is not on the
    # HBM-bound critical path and keeps every row summing to exactly 1.
    mx = jnp.max(scores, axis=-1, keepdims=True)
    ex = jnp.exp(scores - mx)
    denom = jnp.sum(ex, axis=-1, keepdims=True)
    o_ref[...] = (ex / denom).astype(o_ref.dtype)


def prepare_attention_params(W, b, v, decoder_hidden_dim, encoder_dtype=jnp.float32):
    """One-time parameter prep (hoisted out of the per-call wrapper).

    W: (Dd, Dd + E) PyTorch nn.Linear weight, b: (Dd,), v: (Dd,).
    cat order in the reference is (hidden, encoder_outputs):
      columns [0:Dd) of W multiply hidden, columns [Dd:) multiply the encoder.
    Set encoder_dtype=jnp.bfloat16 when feeding a bf16 encoder to halve the
    dominant HBM traffic (matmuls still accumulate in f32).
    """
    Dd = decoder_hidden_dim
    Wh = jnp.asarray(W[:, :Dd].T, jnp.float32)            # (Dd, Dd)
    We = jnp.asarray(W[:, Dd:].T, encoder_dtype)          # (E, Dd)
    b2 = jnp.asarray(b, jnp.float32).reshape(1, Dd)
    v3 = jnp.asarray(v, jnp.float32).reshape(1, 1, Dd)
    return Wh, We, b2, v3


@jax.jit
def attention_pallas(hidden, encoder_outputs, mask, Wh, We, b2, v3):
    """hidden (B, Dd), encoder_outputs (B, S, E), mask (B, S) -> (B, S) f32."""
    B, S, E = encoder_outputs.shape
    Dd = hidden.shape[1]
    enc_bytes = jnp.dtype(encoder_outputs.dtype).itemsize

    vmem_limit = _vmem_limit_bytes()
    TB = _choose_batch_block(B, S, E, Dd, enc_bytes, vmem_limit)
    grid = (B // TB,)

    mask_i32 = mask.astype(jnp.int32)

    out = pl.pallas_call(
        attention_kernel,
        out_shape=jax.ShapeDtypeStruct((B, S), jnp.float32),
        grid=grid,
        in_specs=[
            pl.BlockSpec((TB, Dd), lambda i: (i, 0)),         # hidden
            pl.BlockSpec((TB, S, E), lambda i: (i, 0, 0)),    # encoder (no HBM pad)
            pl.BlockSpec((TB, S), lambda i: (i, 0)),          # mask
            pl.BlockSpec((Dd, Dd), lambda i: (0, 0)),         # Wh (resident)
            pl.BlockSpec((E, Dd), lambda i: (0, 0)),          # We (resident)
            pl.BlockSpec((1, Dd), lambda i: (0, 0)),          # bias
            pl.BlockSpec((1, 1, Dd), lambda i: (0, 0, 0)),    # v
        ],
        out_specs=pl.BlockSpec((TB, S), lambda i: (i, 0)),
        compiler_params=pltpu.CompilerParams(
            dimension_semantics=("parallel",),  # batch blocks across v7x's 2 TCs
            vmem_limit_bytes=vmem_limit,
        ),
    )(hidden, encoder_outputs, mask_i32, Wh, We, b2, v3)

    return out


def attention_reference(hidden, encoder_outputs, mask, W, b, v):
    """Pure-JAX mirror of the PyTorch forward, for validation."""
    B, S, _ = encoder_outputs.shape
    h_rep = jnp.repeat(hidden[:, None, :], S, axis=1)
    cat = jnp.concatenate([h_rep, encoder_outputs], axis=2)
    energy = jnp.tanh(jnp.einsum("bsi,oi->bso", cat, W) + b)
    scores = jnp.einsum("bso,o->bs", energy, v)
    scores = jnp.where(mask == 0, -1e10, scores)
    return jax.nn.softmax(scores, axis=1)


if __name__ == "__main__":
    # Small shapes consistent with the module.
    B, S = 2, 8
    enc_hidden, dec_hidden = 16, 32
    E = 2 * enc_hidden                 # encoder output feature dim
    in_dim = E + dec_hidden            # Linear input dim

    key = jax.random.PRNGKey(0)
    k_h, k_e, k_m, k_w, k_b, k_v = jax.random.split(key, 6)

    hidden = jax.random.normal(k_h, (B, dec_hidden), dtype=jnp.float32)
    encoder_outputs = jax.random.normal(k_e, (B, S, E), dtype=jnp.float32)
    mask = (jax.random.uniform(k_m, (B, S)) > 0.3).astype(jnp.int32)
    mask = mask.at[:, 0].set(1)        # at least one unmasked position per row

    # Deterministic parameter init (shapes match nn.Linear(in_dim, dec_hidden) + v).
    bound = 1.0 / np.sqrt(in_dim)
    W = jax.random.uniform(k_w, (dec_hidden, in_dim), minval=-bound, maxval=bound,
                           dtype=jnp.float32)
    b = jax.random.uniform(k_b, (dec_hidden,), minval=-bound, maxval=bound,
                           dtype=jnp.float32)
    v = jax.random.uniform(k_v, (dec_hidden,), dtype=jnp.float32)  # torch.rand -> U[0,1)

    # Hoisted one-time parameter prep (not per-call).
    Wh, We, b2, v3 = prepare_attention_params(W, b, v, dec_hidden)

    out = attention_pallas(hidden, encoder_outputs, mask, Wh, We, b2, v3)
    out = jax.block_until_ready(out)

    ref = attention_reference(hidden, encoder_outputs, mask, W, b, v)
    np.testing.assert_allclose(np.asarray(out), np.asarray(ref), rtol=1e-3, atol=1e-4)

    print("KERNEL_OK")
</pallas_src>

<mosaic_0001>
module attributes {stable_mosaic.version = 11 : i64} {
  func.func @attention_kernel(%arg0: i32, %arg1: memref<2x32xf32, #tpu.memory_space<vmem>>, %arg2: memref<2x8x32xf32, #tpu.memory_space<vmem>>, %arg3: memref<2x8xi32, #tpu.memory_space<vmem>>, %arg4: memref<32x32xf32, #tpu.memory_space<vmem>>, %arg5: memref<32x32xf32, #tpu.memory_space<vmem>>, %arg6: memref<1x32xf32, #tpu.memory_space<vmem>>, %arg7: memref<1x1x32xf32, #tpu.memory_space<vmem>>, %arg8: memref<2x8xf32, #tpu.memory_space<vmem>>) attributes {dimension_semantics = [#tpu.dimension_semantics<parallel>], iteration_bounds = array<i64: 1>, scalar_prefetch = 0 : i64, scratch_operands = 0 : i64, tpu.core_type = #tpu.core_type<tc>, window_params = [{transform_indices = @transform_0, window_bounds = array<i64: 2, 32>}, {transform_indices = @transform_1, window_bounds = array<i64: 2, 8, 32>}, {transform_indices = @transform_2, window_bounds = array<i64: 2, 8>}, {pipeline_mode = #tpu.pipeline_mode<synchronous>, transform_indices = @transform_3, window_bounds = array<i64: 32, 32>}, {pipeline_mode = #tpu.pipeline_mode<synchronous>, transform_indices = @transform_4, window_bounds = array<i64: 32, 32>}, {pipeline_mode = #tpu.pipeline_mode<synchronous>, transform_indices = @transform_5, window_bounds = array<i64: 1, 32>}, {pipeline_mode = #tpu.pipeline_mode<synchronous>, transform_indices = @transform_6, window_bounds = array<i64: 1, 1, 32>}, {transform_indices = @transform_7, window_bounds = array<i64: 2, 8>}]} {
    %c0 = arith.constant 0 : index
    %c0_0 = arith.constant 0 : index
    %0 = vector.load %arg1[%c0, %c0_0] : memref<2x32xf32, #tpu.memory_space<vmem>>, vector<2x32xf32>
    %c0_1 = arith.constant 0 : index
    %c0_2 = arith.constant 0 : index
    %1 = vector.load %arg4[%c0_1, %c0_2] : memref<32x32xf32, #tpu.memory_space<vmem>>, vector<32x32xf32>
    %cst = arith.constant dense<0.000000e+00> : vector<2x32xf32>
    %2 = tpu.matmul %0, %1, %cst {dimension_numbers = #tpu.dot_dimension_numbers<[1], [0], [0], [1], [0, 0, 1, 1], [], []>} : vector<2x32xf32>, vector<32x32xf32>, vector<2x32xf32> -> vector<2x32xf32>
    %c0_3 = arith.constant 0 : index
    %c0_4 = arith.constant 0 : index
    %3 = vector.load %arg6[%c0_3, %c0_4] : memref<1x32xf32, #tpu.memory_space<vmem>>, vector<1x32xf32>
    %4 = vector.broadcast %3 : vector<1x32xf32> to vector<2x32xf32>
    %5 = arith.addf %2, %4 : vector<2x32xf32>
    %c0_5 = arith.constant 0 : index
    %c0_6 = arith.constant 0 : index
    %6 = vector.load %arg5[%c0_5, %c0_6] : memref<32x32xf32, #tpu.memory_space<vmem>>, vector<32x32xf32>
    %7 = vector.shape_cast %6 : vector<32x32xf32> to vector<1x32x32xf32>
    %8 = vector.shape_cast %7 : vector<1x32x32xf32> to vector<1x32x32xf32>
    %9 = vector.broadcast %8 : vector<1x32x32xf32> to vector<2x32x32xf32>
    %c0_7 = arith.constant 0 : index
    %c0_8 = arith.constant 0 : index
    %c0_9 = arith.constant 0 : index
    %10 = vector.load %arg2[%c0_7, %c0_8, %c0_9] : memref<2x8x32xf32, #tpu.memory_space<vmem>>, vector<2x8x32xf32>
    "tpu.trace_start"() <{level = 10 : i32, message = "bse,bed->bsd"}> : () -> ()
    %cst_10 = arith.constant dense<0.000000e+00> : vector<2x8x32xf32>
    %11 = tpu.matmul %10, %9, %cst_10 {dimension_numbers = #tpu.dot_dimension_numbers<[2], [1], [1], [2], [0, 0, 0, 1, 1, 2], [0], [0]>} : vector<2x8x32xf32>, vector<2x32x32xf32>, vector<2x8x32xf32> -> vector<2x8x32xf32>
    "tpu.trace_stop"() : () -> ()
    %12 = vector.shape_cast %5 : vector<2x32xf32> to vector<2x1x32xf32>
    %13 = vector.broadcast %12 : vector<2x1x32xf32> to vector<2x8x32xf32>
    %14 = arith.addf %11, %13 : vector<2x8x32xf32>
    %15 = math.tanh %14 : vector<2x8x32xf32>
    %c0_11 = arith.constant 0 : index
    %c0_12 = arith.constant 0 : index
    %c0_13 = arith.constant 0 : index
    %16 = vector.load %arg7[%c0_11, %c0_12, %c0_13] : memref<1x1x32xf32, #tpu.memory_space<vmem>>, vector<1x1x32xf32>
    %17 = vector.broadcast %16 : vector<1x1x32xf32> to vector<2x8x32xf32>
    %18 = arith.mulf %15, %17 : vector<2x8x32xf32>
    %cst_14 = arith.constant dense<0.000000e+00> : vector<2x8xf32>
    %19 = vector.multi_reduction <add>, %18, %cst_14 [2] : vector<2x8x32xf32> to vector<2x8xf32>
    %c0_15 = arith.constant 0 : index
    %c0_16 = arith.constant 0 : index
    %20 = vector.load %arg3[%c0_15, %c0_16] : memref<2x8xi32, #tpu.memory_space<vmem>>, vector<2x8xi32>
    %c0_i32 = arith.constant 0 : i32
    %21 = vector.broadcast %c0_i32 : i32 to vector<2x8xi32>
    %22 = arith.cmpi eq, %20, %21 : vector<2x8xi32>
    %cst_17 = arith.constant -1.000000e+10 : f32
    %23 = vector.broadcast %cst_17 : f32 to vector<2x8xf32>
    %24 = arith.select %22, %23, %19 : vector<2x8xi1>, vector<2x8xf32>
    %cst_18 = arith.constant dense<0xFF800000> : vector<2xf32>
    %25 = vector.multi_reduction <maximumf>, %24, %cst_18 [1] : vector<2x8xf32> to vector<2xf32>
    %26 = vector.shape_cast %25 : vector<2xf32> to vector<2x1xf32>
    %27 = vector.broadcast %26 : vector<2x1xf32> to vector<2x8xf32>
    %28 = arith.subf %24, %27 : vector<2x8xf32>
    %29 = math.exp %28 : vector<2x8xf32>
    %cst_19 = arith.constant dense<0.000000e+00> : vector<2xf32>
    %30 = vector.multi_reduction <add>, %29, %cst_19 [1] : vector<2x8xf32> to vector<2xf32>
    %31 = vector.shape_cast %30 : vector<2xf32> to vector<2x1xf32>
    %32 = vector.broadcast %31 : vector<2x1xf32> to vector<2x8xf32>
    %33 = arith.divf %29, %32 : vector<2x8xf32>
    %c0_20 = arith.constant 0 : index
    %c0_21 = arith.constant 0 : index
    %34 = vector.load %arg8[%c0_20, %c0_21] : memref<2x8xf32, #tpu.memory_space<vmem>>, vector<2x8xf32>
    tpu.vector_store %arg8[%c0_20, %c0_21], %33 {strides = array<i32>} : memref<2x8xf32, #tpu.memory_space<vmem>>, vector<2x8xf32>,
    return
  }
  func.func @transform_0(%arg0: i32) -> (i32, i32) {
    %c0_i32 = arith.constant 0 : i32
    %c0_i32_0 = arith.constant 0 : i32
    return %arg0, %c0_i32 : i32, i32
  }
  func.func @transform_1(%arg0: i32) -> (i32, i32, i32) {
    %c0_i32 = arith.constant 0 : i32
    %c0_i32_0 = arith.constant 0 : i32
    %c0_i32_1 = arith.constant 0 : i32
    return %arg0, %c0_i32, %c0_i32_0 : i32, i32, i32
  }
  func.func @transform_2(%arg0: i32) -> (i32, i32) {
    %c0_i32 = arith.constant 0 : i32
    %c0_i32_0 = arith.constant 0 : i32
    return %arg0, %c0_i32 : i32, i32
  }
  func.func @transform_3(%arg0: i32) -> (i32, i32) {
    %c0_i32 = arith.constant 0 : i32
    %c0_i32_0 = arith.constant 0 : i32
    %c0_i32_1 = arith.constant 0 : i32
    return %c0_i32, %c0_i32_0 : i32, i32
  }
  func.func @transform_4(%arg0: i32) -> (i32, i32) {
    %c0_i32 = arith.constant 0 : i32
    %c0_i32_0 = arith.constant 0 : i32
    %c0_i32_1 = arith.constant 0 : i32
    return %c0_i32, %c0_i32_0 : i32, i32
  }
  func.func @transform_5(%arg0: i32) -> (i32, i32) {
    %c0_i32 = arith.constant 0 : i32
    %c0_i32_0 = arith.constant 0 : i32
    %c0_i32_1 = arith.constant 0 : i32
    return %c0_i32, %c0_i32_0 : i32, i32
  }
  func.func @transform_6(%arg0: i32) -> (i32, i32, i32) {
    %c0_i32 = arith.constant 0 : i32
    %c0_i32_0 = arith.constant 0 : i32
    %c0_i32_1 = arith.constant 0 : i32
    %c0_i32_2 = arith.constant 0 : i32
    return %c0_i32, %c0_i32_0, %c0_i32_1 : i32, i32, i32
  }
  func.func @transform_7(%arg0: i32) -> (i32, i32) {
    %c0_i32 = arith.constant 0 : i32
    %c0_i32_0 = arith.constant 0 : i32
    return %arg0, %c0_i32 : i32, i32
  }
}

</mosaic_0001>

<llo_original>
// kernel: attention_pallas.1
$region0: #{attention_pallas.1}
  #allocation0 [shape = 'u32[]', space=smem, size = 0x4, offset = 0x4, fixed_abs, tag = 'smem constant byte address 0x4 - core index']
  #allocation1 [shape = 'u32[144,128]{1,0:T(1,128)}', space=vmem, size = 0x12000, scoped, tag = 'internal scratch']
  %s0 = inlined_call_operand.hbm [shape: f32[2,32], index: 0, kind: input, shape index: {}]
  %s1 = inlined_call_operand.hbm [shape: f32[2,8,32], index: 1, kind: input, shape index: {}]
  %s2 = inlined_call_operand.vmem [shape: s32[2,8], index: 2, kind: input, shape index: {}]
  %s3 = inlined_call_operand.hbm [shape: f32[32,32], index: 3, kind: input, shape index: {}]
  %s4 = inlined_call_operand.hbm [shape: f32[32,32], index: 4, kind: input, shape index: {}]
  %s5 = inlined_call_operand.vmem [shape: f32[1,32], index: 5, kind: input, shape index: {}]
  %s6 = inlined_call_operand.vmem [shape: f32[1,1,32], index: 6, kind: input, shape index: {}]
  %s7 = inlined_call_operand.hbm [shape: f32[2,8], index: 7, kind: output, shape index: {}]
  %s8 = sld [smem:[#allocation0]]
  $region54: #{attention_pallas.1} parent=0
    _
  %s10 = ssub.s32 1, %s8
  %s11 = scalar_select 0, %s10, %s8
  $region1: #{attention_pallas.1} parent=0
    #allocation2 [shape = 'u8[1024]{0}', space=vmem, size = 0x400, scoped, tag = 'input window, operand 0, single buffered']
    #allocation3 [shape = 's32[1]{0}', space=sflag, size = 0x4, scoped, tag = 'scoped memory for attention_pallas.1']
    #allocation4 [shape = 's32[1]{0}', space=sflag, size = 0x4, scoped, tag = 'scoped memory for attention_pallas.1']
    #allocation5 [shape = 'u8[8192]{0}', space=vmem, size = 0x2000, scoped, tag = 'input window, operand 1, single buffered']
    #allocation6 [shape = 's32[1]{0}', space=sflag, size = 0x4, scoped, tag = 'scoped memory for attention_pallas.1']
    #allocation7 [shape = 'u8[16384]{0}', space=vmem, size = 0x4000, scoped, tag = 'input window, operand 3, single buffered']
    #allocation8 [shape = 'u8[16384]{0}', space=vmem, size = 0x4000, scoped, tag = 'input window, operand 4, single buffered']
    #allocation9 [shape = 's32[1]{0}', space=sflag, size = 0x4, scoped, tag = 'scoped memory for attention_pallas.1']
    #allocation10 [shape = 'u8[1024]{0}', space=vmem, size = 0x400, scoped, tag = 'output window, operand 0, single buffered']
    %12 = vsyncpa [#allocation3], 0
    %13 = vsyncpa [#allocation6], 0
    %14 = vsyncpa [#allocation9], 0
    %15 = vsyncpa [#allocation4], 0
    // Predicated region
    $region2: #{attention_pallas.1} parent=1 // pred_check
      _
    $region3: #{attention_pallas.1} parent=1 // pred_check_branch
      %17 = sbr.rel (0) target = $region5
    $region4: #{attention_pallas.1} parent=1 // pred_region
      %s19 = ssub.s32 32, 32
      %20 = vsyncadd [#allocation3], %s19
      %s22 = sshll.u32 [#allocation2], 4
      %s23 = int_to_ptr.vmem [resolvable:$true] %s22
      %25 = dma.hbm_to_vmem [thread:$0]  %s0, 32, %s23, [#allocation3]
    $region5: #{attention_pallas.1} parent=1 // pred_fallthru
      _
    // Predicated region
    $region6: #{attention_pallas.1} parent=1 // pred_check
      _
    $region7: #{attention_pallas.1} parent=1 // pred_check_branch
      %27 = sbr.rel (0) target = $region9
    $region8: #{attention_pallas.1} parent=1 // pred_region
      %s29 = ssub.s32 256, 256
      %30 = vsyncadd [#allocation6], %s29
      %s31 = sshll.u32 [#allocation5], 4
      %s32 = int_to_ptr.vmem [resolvable:$true] %s31
      %37 = dma.hbm_to_vmem [thread:$0]  %s1, 256, %s32, [#allocation6], 128, 128, 8
    $region9: #{attention_pallas.1} parent=1 // pred_fallthru
      _
    // Predicated region
    $region10: #{attention_pallas.1} parent=1 // pred_check
      _
    $region11: #{attention_pallas.1} parent=1 // pred_check_branch
      %39 = sbr.rel (0) target = $region13
    $region12: #{attention_pallas.1} parent=1 // pred_region
      _
    $region13: #{attention_pallas.1} parent=1 // pred_fallthru
      _
    // Predicated region
    $region14: #{attention_pallas.1} parent=1 // pred_check
      _
    $region15: #{attention_pallas.1} parent=1 // pred_check_branch
      %41 = sbr.rel (0) target = $region17
    $region16: #{attention_pallas.1} parent=1 // pred_region
      %s43 = ssub.s32 512, 512
      %44 = vsyncadd [#allocation6], %s43
      %s45 = sshll.u32 [#allocation7], 4
      %s46 = int_to_ptr.vmem [resolvable:$true] %s45
      %51 = dma.hbm_to_vmem [thread:$0]  %s3, 512, %s46, [#allocation6], 128, 128, 8
    $region17: #{attention_pallas.1} parent=1 // pred_fallthru
      _
    // Predicated region
    $region18: #{attention_pallas.1} parent=1 // pred_check
      _
    $region19: #{attention_pallas.1} parent=1 // pred_check_branch
      %53 = sbr.rel (0) target = $region21
    $region20: #{attention_pallas.1} parent=1 // pred_region
      %s55 = ssub.s32 512, 512
      %56 = vsyncadd [#allocation9], %s55
      %s57 = sshll.u32 [#allocation8], 4
      %s58 = int_to_ptr.vmem [resolvable:$true] %s57
      %63 = dma.hbm_to_vmem [thread:$0]  %s4, 512, %s58, [#allocation9], 128, 128, 8
    $region21: #{attention_pallas.1} parent=1 // pred_fallthru
      _
    // Predicated region
    $region22: #{attention_pallas.1} parent=1 // pred_check
      _
    $region23: #{attention_pallas.1} parent=1 // pred_check_branch
      %65 = sbr.rel (0) target = $region25
    $region24: #{attention_pallas.1} parent=1 // pred_region
      _
    $region25: #{attention_pallas.1} parent=1 // pred_fallthru
      _
    // Predicated region
    $region26: #{attention_pallas.1} parent=1 // pred_check
      _
    $region27: #{attention_pallas.1} parent=1 // pred_check_branch
      %67 = sbr.rel (0) target = $region29
    $region28: #{attention_pallas.1} parent=1 // pred_region
      _
    $region29: #{attention_pallas.1} parent=1 // pred_fallthru
      _
    // Predicated region
    $region30: #{attention_pallas.1} parent=1 // pred_check
      _
    $region31: #{attention_pallas.1} parent=1 // pred_check_branch
      %69 = sbr.rel (0) target = $region33
    $region32: #{attention_pallas.1} parent=1 // pred_region
      %70 = dma.done [#allocation3], 32
    $region33: #{attention_pallas.1} parent=1 // pred_fallthru
      _
    // Predicated region
    $region34: #{attention_pallas.1} parent=1 // pred_check
      _
    $region35: #{attention_pallas.1} parent=1 // pred_check_branch
      %72 = sbr.rel (0) target = $region37
    $region36: #{attention_pallas.1} parent=1 // pred_region
      %73 = dma.done [#allocation6], 256
    $region37: #{attention_pallas.1} parent=1 // pred_fallthru
      _
    // Predicated region
    $region38: #{attention_pallas.1} parent=1 // pred_check
      _
    $region39: #{attention_pallas.1} parent=1 // pred_check_branch
      %75 = sbr.rel (0) target = $region41
    $region40: #{attention_pallas.1} parent=1 // pred_region
      %76 = dma.done [#allocation6], 512
    $region41: #{attention_pallas.1} parent=1 // pred_fallthru
      _
    // Predicated region
    $region42: #{attention_pallas.1} parent=1 // pred_check
      _
    $region43: #{attention_pallas.1} parent=1 // pred_check_branch
      %78 = sbr.rel (0) target = $region45
    $region44: #{attention_pallas.1} parent=1 // pred_region
      %79 = dma.done [#allocation9], 512
    $region45: #{attention_pallas.1} parent=1 // pred_fallthru
      _
    %v80 = vld [vmem:[#allocation2] sm:$0x3]
    %v81 = vld [vmem:[#allocation7] sm:$0xff]
    %v82 = vld [vmem:[#allocation7 + $0x8] sm:$0xff]
    %v83 = vld [vmem:[#allocation7 + $0x10] sm:$0xff]
    %v84 = vld [vmem:[#allocation7 + $0x18] sm:$0xff]
    %v85 = vld [vmem:[%s5] sm:$0x1]
    %v87 = vlaneseq
    %v88 = vshrl.u32 %v87, 7
    %v89 = vsub.s32 0, %v88
    %v90 = vrot.slane %v85, %v89
    %vm92 = vcmask 261120
    %v94 = vsel %vm92, %v80, 0
    %96 = vmatprep.subr.mxu0 0.0
    %97 = vmatpush1.msra.mxu0 %v81
    %98 = vmatprep.subr.mxu0 0.0
    %99 = vmatpush1.msra.mxu0 %v82
    %100 = vmatprep.subr.mxu0 0.0
    %101 = vmatpush1.msra.mxu0 %v83
    %102 = vmatprep.subr.mxu0 0.0
    %103 = vmatpush1.msra.mxu0 %v84
    %104 = vmatprep.subr.mxu0 0.0
    %105 = vmatpush1.msra.mxu0 0.0
    %106 = vmatprep.subr.mxu0 0.0
    %107 = vmatpush1.msra.mxu0 0.0
    %108 = vmatprep.subr.mxu0 0.0
    %109 = vmatpush1.msra.mxu0 0.0
    %110 = vmatprep.subr.mxu0 0.0
    %111 = vmatpush1.msra.mxu0 0.0
    %112 = vmatprep.subr.mxu0 0.0
    %113 = vmatpush1.msra.mxu0 0.0
    %114 = vmatprep.subr.mxu0 0.0
    %115 = vmatpush1.msra.mxu0 0.0
    %116 = vmatprep.subr.mxu0 0.0
    %117 = vmatpush1.msra.mxu0 0.0
    %118 = vmatprep.subr.mxu0 0.0
    %119 = vmatpush1.msra.mxu0 0.0
    %120 = vmatprep.subr.mxu0 0.0
    %121 = vmatpush1.msra.mxu0 0.0
    %122 = vmatprep.subr.mxu0 0.0
    %123 = vmatpush1.msra.mxu0 0.0
    %124 = vmatprep.subr.mxu0 0.0
    %125 = vmatpush1.msra.mxu0 0.0
    %126 = vmatprep.subr.mxu0 0.0
    %127 = vmatpush1.msra.mxu0 0.0
    %128 = vmatprep.subr.mxu0 0.0
    %129 = vmatpush1.msra.mxu0 0.0
    %130 = vmatprep.subr.mxu0 0.0
    %131 = vmatpush1.msra.mxu0 0.0
    %132 = vmatprep.subr.mxu0 0.0
    %133 = vmatpush1.msra.mxu0 0.0
    %134 = vmatprep.subr.mxu0 0.0
    %135 = vmatpush1.msra.mxu0 0.0
    %136 = vmatprep.subr.mxu0 0.0
    %137 = vmatpush1.msra.mxu0 0.0
    %138 = vmatprep.subr.mxu0 0.0
    %139 = vmatpush1.msra.mxu0 0.0
    %140 = vmatprep.subr.mxu0 0.0
    %141 = vmatpush1.msra.mxu0 0.0
    %142 = vmatprep.subr.mxu0 0.0
    %143 = vmatpush1.msra.mxu0 0.0
    %144 = vmatprep.subr.mxu0 0.0
    %145 = vmatpush1.msra.mxu0 0.0
    %146 = vmatprep.subr.mxu0 0.0
    %147 = vmatpush1.msra.mxu0 0.0
    %148 = vmatprep.subr.mxu0 0.0
    %149 = vmatpush1.msra.mxu0 0.0
    %150 = vmatprep.subr.mxu0 0.0
    %151 = vmatpush1.msra.mxu0 0.0
    %152 = vmatprep.subr.mxu0 0.0
    %153 = vmatpush1.msra.mxu0 0.0
    %154 = vmatprep.subr.mxu0 0.0
    %155 = vmatpush1.msra.mxu0 0.0
    %156 = vmatprep.subr.mxu0 0.0
    %157 = vmatpush1.msra.mxu0 0.0
    %158 = vmatprep.subr.mxu0 0.0
    %159 = vmatpush1.msra.mxu0 0.0
    %160 = vmatprep.mubr.f32.mxu0 0.0
    %161 = vmatmul.mubr.f32.gmra.mrb[0].mxu0 %v94
    %v162 = vpop.f32.mrb[0].mxu0
    %v163 = vadd.f32 %v90, %v162
    %v164 = vpop.f32.mrb[0].mxu0
    %165 = vdwg.mxu0
    %v166 = vld [vmem:[#allocation8] sm:$0xff]
    %v167 = vld [vmem:[#allocation8 + $0x8] sm:$0xff]
    %v168 = vld [vmem:[#allocation8 + $0x10] sm:$0xff]
    %v169 = vld [vmem:[#allocation8 + $0x18] sm:$0xff]
    %v170 = vld [vmem:[#allocation5] sm:$0xff]
    %v171 = vld [vmem:[#allocation5 + $0x8] sm:$0xff]
    %v174 = vunpack.c.l.s4 1966171168
    %v175 = vunpack.c.0.s8 %v174
    %v176 = vlaneseq
    %v177 = vshrl.u32 %v176, 7
    %v178 = vsub.s32 %v175, %v177
    %v179 = vrot.slane %v163, %v178
    %v180 = vcombine.high %v179, %v179
    %v182 = vunpack.c.l.s4 1966171168
    %v183 = vunpack.c.0.s8 %v182
    %v184 = vlaneseq
    %v185 = vshrl.u32 %v184, 7
    %v186 = vsub.s32 %v183, %v185
    %v187 = vrot.slane %v179, %v186
    %v189 = vunpack.c.l.s4 1966171168
    %v190 = vunpack.c.0.s8 %v189
    %v191 = vlaneseq
    %v192 = vshrl.u32 %v191, 7
    %v193 = vsub.s32 %v190, %v192
    %v194 = vrot.slane %v180, %v193
    %v195 = vlaneseq
    %v196 = vshrl.u32 %v195, 7
    %v197 = vsub.s32 0, %v196
    %v198 = vrot.slane %v187, %v197
    %v199 = vlaneseq
    %v200 = vshrl.u32 %v199, 7
    %v201 = vsub.s32 0, %v200
    %v202 = vrot.slane %v194, %v201
    %v206 = vsel %vm92, %v170, 0
    %208 = vmatprep.subr.mxu0 0.0
    %209 = vmatpush1.msra.mxu0 %v166
    %210 = vmatprep.subr.mxu0 0.0
    %211 = vmatpush1.msra.mxu0 %v167
    %212 = vmatprep.subr.mxu0 0.0
    %213 = vmatpush1.msra.mxu0 %v168
    %214 = vmatprep.subr.mxu0 0.0
    %215 = vmatpush1.msra.mxu0 %v169
    %216 = vmatprep.subr.mxu0 0.0
    %217 = vmatpush1.msra.mxu0 0.0
    %218 = vmatprep.subr.mxu0 0.0
    %219 = vmatpush1.msra.mxu0 0.0
    %220 = vmatprep.subr.mxu0 0.0
    %221 = vmatpush1.msra.mxu0 0.0
    %222 = vmatprep.subr.mxu0 0.0
    %223 = vmatpush1.msra.mxu0 0.0
    %224 = vmatprep.subr.mxu0 0.0
    %225 = vmatpush1.msra.mxu0 0.0
    %226 = vmatprep.subr.mxu0 0.0
    %227 = vmatpush1.msra.mxu0 0.0
    %228 = vmatprep.subr.mxu0 0.0
    %229 = vmatpush1.msra.mxu0 0.0
    %230 = vmatprep.subr.mxu0 0.0
    %231 = vmatpush1.msra.mxu0 0.0
    %232 = vmatprep.subr.mxu0 0.0
    %233 = vmatpush1.msra.mxu0 0.0
    %234 = vmatprep.subr.mxu0 0.0
    %235 = vmatpush1.msra.mxu0 0.0
    %236 = vmatprep.subr.mxu0 0.0
    %237 = vmatpush1.msra.mxu0 0.0
    %238 = vmatprep.subr.mxu0 0.0
    %239 = vmatpush1.msra.mxu0 0.0
    %240 = vmatprep.subr.mxu0 0.0
    %241 = vmatpush1.msra.mxu0 0.0
    %242 = vmatprep.subr.mxu0 0.0
    %243 = vmatpush1.msra.mxu0 0.0
    %244 = vmatprep.subr.mxu0 0.0
    %245 = vmatpush1.msra.mxu0 0.0
    %246 = vmatprep.subr.mxu0 0.0
    %247 = vmatpush1.msra.mxu0 0.0
    %248 = vmatprep.subr.mxu0 0.0
    %249 = vmatpush1.msra.mxu0 0.0
    %250 = vmatprep.subr.mxu0 0.0
    %251 = vmatpush1.msra.mxu0 0.0
    %252 = vmatprep.subr.mxu0 0.0
    %253 = vmatpush1.msra.mxu0 0.0
    %254 = vmatprep.subr.mxu0 0.0
    %255 = vmatpush1.msra.mxu0 0.0
    %256 = vmatprep.subr.mxu0 0.0
    %257 = vmatpush1.msra.mxu0 0.0
    %258 = vmatprep.subr.mxu0 0.0
    %259 = vmatpush1.msra.mxu0 0.0
    %260 = vmatprep.subr.mxu0 0.0
    %261 = vmatpush1.msra.mxu0 0.0
    %262 = vmatprep.subr.mxu0 0.0
    %263 = vmatpush1.msra.mxu0 0.0
    %264 = vmatprep.subr.mxu0 0.0
    %265 = vmatpush1.msra.mxu0 0.0
    %266 = vmatprep.subr.mxu0 0.0
    %267 = vmatpush1.msra.mxu0 0.0
    %268 = vmatprep.subr.mxu0 0.0
    %269 = vmatpush1.msra.mxu0 0.0
    %270 = vmatprep.subr.mxu0 0.0
    %271 = vmatpush1.msra.mxu0 0.0
    %272 = vmatprep.mubr.f32.mxu0 0.0
    %273 = vmatmul.mubr.f32.gmra.mrb[0].mxu0 %v206
    %v274 = vpop.f32.mrb[0].mxu0
    %v275 = vadd.f32 %v198, %v274
    %v276 = vpop.f32.mrb[0].mxu0
    %277 = vdwg.mxu0
    %v279 = vsel %vm92, %v171, 0
    %281 = vmatprep.subr.mxu0 0.0
    %282 = vmatpush1.msra.mxu0 %v166
    %283 = vmatprep.subr.mxu0 0.0
    %284 = vmatpush1.msra.mxu0 %v167
    %285 = vmatprep.subr.mxu0 0.0
    %286 = vmatpush1.msra.mxu0 %v168
    %287 = vmatprep.subr.mxu0 0.0
    %288 = vmatpush1.msra.mxu0 %v169
    %289 = vmatprep.subr.mxu0 0.0
    %290 = vmatpush1.msra.mxu0 0.0
    %291 = vmatprep.subr.mxu0 0.0
    %292 = vmatpush1.msra.mxu0 0.0
    %293 = vmatprep.subr.mxu0 0.0
    %294 = vmatpush1.msra.mxu0 0.0
    %295 = vmatprep.subr.mxu0 0.0
    %296 = vmatpush1.msra.mxu0 0.0
    %297 = vmatprep.subr.mxu0 0.0
    %298 = vmatpush1.msra.mxu0 0.0
    %299 = vmatprep.subr.mxu0 0.0
    %300 = vmatpush1.msra.mxu0 0.0
    %301 = vmatprep.subr.mxu0 0.0
    %302 = vmatpush1.msra.mxu0 0.0
    %303 = vmatprep.subr.mxu0 0.0
    %304 = vmatpush1.msra.mxu0 0.0
    %305 = vmatprep.subr.mxu0 0.0
    %306 = vmatpush1.msra.mxu0 0.0
    %307 = vmatprep.subr.mxu0 0.0
    %308 = vmatpush1.msra.mxu0 0.0
    %309 = vmatprep.subr.mxu0 0.0
    %310 = vmatpush1.msra.mxu0 0.0
    %311 = vmatprep.subr.mxu0 0.0
    %312 = vmatpush1.msra.mxu0 0.0
    %313 = vmatprep.subr.mxu0 0.0
    %314 = vmatpush1.msra.mxu0 0.0
    %315 = vmatprep.subr.mxu0 0.0
    %316 = vmatpush1.msra.mxu0 0.0
    %317 = vmatprep.subr.mxu0 0.0
    %318 = vmatpush1.msra.mxu0 0.0
    %319 = vmatprep.subr.mxu0 0.0
    %320 = vmatpush1.msra.mxu0 0.0
    %321 = vmatprep.subr.mxu0 0.0
    %322 = vmatpush1.msra.mxu0 0.0
    %323 = vmatprep.subr.mxu0 0.0
    %324 = vmatpush1.msra.mxu0 0.0
    %325 = vmatprep.subr.mxu0 0.0
    %326 = vmatpush1.msra.mxu0 0.0
    %327 = vmatprep.subr.mxu0 0.0
    %328 = vmatpush1.msra.mxu0 0.0
    %329 = vmatprep.subr.mxu0 0.0
    %330 = vmatpush1.msra.mxu0 0.0
    %331 = vmatprep.subr.mxu0 0.0
    %332 = vmatpush1.msra.mxu0 0.0
    %333 = vmatprep.subr.mxu0 0.0
    %334 = vmatpush1.msra.mxu0 0.0
    %335 = vmatprep.subr.mxu0 0.0
    %336 = vmatpush1.msra.mxu0 0.0
    %337 = vmatprep.subr.mxu0 0.0
    %338 = vmatpush1.msra.mxu0 0.0
    %339 = vmatprep.subr.mxu0 0.0
    %340 = vmatpush1.msra.mxu0 0.0
    %341 = vmatprep.subr.mxu0 0.0
    %342 = vmatpush1.msra.mxu0 0.0
    %343 = vmatprep.subr.mxu0 0.0
    %344 = vmatpush1.msra.mxu0 0.0
    %345 = vmatprep.mubr.f32.mxu0 0.0
    %346 = vmatmul.mubr.f32.gmra.mrb[0].mxu0 %v279
    %v347 = vpop.f32.mrb[0].mxu0
    %v348 = vadd.f32 %v202, %v347
    %v349 = vpop.f32.mrb[0].mxu0
    %350 = vdwg.mxu0
    %v351 = vtanh.pop %v275
    %v352 = vtanh.pop %v348
    %v353 = vld [vmem:[%s6] sm:$0x1]
    %v355 = vlaneseq
    %v356 = vshrl.u32 %v355, 7
    %v357 = vsub.s32 0, %v356
    %v358 = vrot.slane %v353, %v357
    %v360 = vmul.f32 %v351, %v358
    %v361 = vmul.f32 %v352, %v358
    %v362 = vsel %vm92, %v360, 0.0
    %363 = vadd.xlane.f32.xlu0 %v362
    %v364 = vpop.xlane.xlu0 %363
    %v365 = vsel %vm92, %v361, 0.0
    %366 = vadd.xlane.f32.xlu0 %v365
    %v367 = vpop.xlane.xlu0 %366
    %v368 = vld [vmem:[%s2] sm:$0x3]
    %vm369 = vcmp.eq.s32.totalorder %v368, 0
    %v372 = vlaneseq
    %v373 = vand.u32 %v372, 127
    %v374 = vlaneseq
    %v375 = vshrl.u32 %v374, 7
    %v376 = vsub.s32 %v373, %v375
    %v377 = vrot.slane %v364, %v376
    %v378 = vlaneseq
    %v379 = vshrl.u32 %v378, 7
    %v380 = vsub.s32 %v373, %v379
    %v381 = vrot.slane %v367, %v380
    %vm382 = vcmask 1041409
    %v383 = vsel %vm382, %v381, %v377
    %v385 = vsel %vm369, -1e+10, %v383
    %vm386 = vcmask 58368
    %v387 = vsel %vm386, %v385, -inf
    %388 = vmax.xlane.f32.xlu0 %v387
    %v389 = vpop.xlane.xlu0 %388
    %v390 = vsub.f32 %v385, %v389
    %v391 = vmul.f32 %v390, 1.442695
    %v392 = vpow.pop %v391
    %v393 = vsel %vm386, %v392, 0.0
    %394 = vadd.xlane.f32.xlu0 %v393
    %v395 = vpop.xlane.xlu0 %394
    %v396 = vrcp.pop %v395
    %v397 = vmul.f32 %v392, %v396
    %398 = vst.msk [vmem:[#allocation10] sm:$0x3] %vm386, %v397
    // Predicated region
    $region46: #{attention_pallas.1} parent=1 // pred_check
      _
    $region47: #{attention_pallas.1} parent=1 // pred_check_branch
      %400 = sbr.rel (0) target = $region49
    $region48: #{attention_pallas.1} parent=1 // pred_region
      %s402 = ssub.s32 32, 32
      %403 = vsyncadd [#allocation4], %s402
      %s405 = sshll.u32 [#allocation10], 4
      %s406 = int_to_ptr.vmem [resolvable:$true] %s405
      %408 = dma.vmem_to_hbm [thread:$0]  %s406, 32, %s7, [#allocation4]
    $region49: #{attention_pallas.1} parent=1 // pred_fallthru
      _
    // Predicated region
    $region50: #{attention_pallas.1} parent=1 // pred_check
      _
    $region51: #{attention_pallas.1} parent=1 // pred_check_branch
      %410 = sbr.rel (0) target = $region53
    $region52: #{attention_pallas.1} parent=1 // pred_region
      %411 = dma.done [#allocation4], 32
    $region53: #{attention_pallas.1} parent=1 // pred_fallthru
      _
    %412 = vsyncpa [#allocation3], 1
    %413 = vsyncpa [#allocation6], 1
    %414 = vsyncpa [#allocation9], 1
    %415 = vsyncpa [#allocation4], 1

</llo_original>
